<compile_context>
chip_gen: v5e
topology: v5e:2x2
jax: 0.10.0
libtpu: 0.0.40
codegen_flags: <defaults>
</compile_context>

<pallas_src>
import functools

import jax
import jax.numpy as jnp
from jax.experimental import pallas as pl
from jax.experimental.pallas import tpu as pltpu


# Per-step data (all input slabs + the output slab) target / floor, and the
# number of grid steps we aim for so the software pipeline has work to overlap.
_TARGET_BLOCK_BYTES = 8 << 20
_MIN_BLOCK_BYTES = 1 << 20
_TARGET_STEPS = 8


# ----------------------------------------------------------------------------
# Kernels
# ----------------------------------------------------------------------------
def _concat_lane_kernel(*refs, lane_sizes):
    """Inputs (bb, C_i*HW); output (bb, Ctot*HW).  Copy each input into its
    contiguous lane-dim slice of the output (lane-dense, unmasked stores)."""
    in_refs, o_ref = refs[:-1], refs[-1]
    off = 0
    for r, n in zip(in_refs, lane_sizes):
        o_ref[:, off:off + n] = r[...]
        off += n


def _concat_channel_kernel(*refs, channel_sizes):
    """Inputs (1, C_i, hw_tile); output (1, Ctot, hw_tile).  Copy each input
    into its channel slice of the output tile (hw_tile is a multiple of 128)."""
    # TODO(synk): for packed dtypes (bf16/int8) channel offsets that are not
    # multiples of the sublane pack factor cost extra sublane shuffles; the
    # lane-flat path above avoids this and is preferred whenever it fits VMEM.
    in_refs, o_ref = refs[:-1], refs[-1]
    off = 0
    for r, c in zip(in_refs, channel_sizes):
        o_ref[:, off:off + c, :] = r[...]
        off += c


# ----------------------------------------------------------------------------
# Tiling heuristics
# ----------------------------------------------------------------------------
def _pick_batch_block(B, row_bytes, target, min_bytes, target_steps):
    """Batch rows per grid step for the lane-flat path, or None if even the
    smallest legal block exceeds `target` (caller then falls back to HW
    tiling).  Legal blocks are divisors of B that are either B itself or a
    multiple of 8, keeping the second-to-last block dim (8,128)-friendly."""
    cands = [d for d in range(1, B + 1)
             if B % d == 0 and (d == B or d % 8 == 0)]
    fitting = [d for d in cands if d * row_bytes <= target]
    if not fitting:
        return None
    # Largest block that still leaves enough steps for pipeline overlap ...
    for d in sorted(fitting, reverse=True):
        if B // d >= target_steps and d * row_bytes >= min_bytes:
            return d
    # ... otherwise most steps while staying above the HBM-roofline floor ...
    for d in sorted(fitting):
        if d * row_bytes >= min_bytes:
            return d
    # ... otherwise everything is tiny: just take the biggest block.
    return max(fitting)


def _pick_hw_tile(HW, lane_bytes, target):
    """Lane-dim tile (multiple of 128) so a (1, Ctot, hw_tile) step plus its
    output stays under `target`; uses the full HW when everything fits."""
    max_lanes = max(128, (target // lane_bytes) // 128 * 128)
    return HW if max_lanes >= HW else int(max_lanes)


# ----------------------------------------------------------------------------
# Wrapper: mirrors Concat(dimension=1).forward(list_of_tensors)
# ----------------------------------------------------------------------------
def concat(xs, dimension=1, *, block_bytes_target=_TARGET_BLOCK_BYTES):
    # TODO(synk): only dimension=1 on 4D NCHW tensors is implemented — the
    # only way yolov5 uses the Concat module.
    assert dimension == 1
    assert len(xs) >= 1
    B, _, H, W = xs[0].shape
    dtype = xs[0].dtype
    for x in xs:
        assert x.ndim == 4 and x.shape[0] == B and x.shape[2:] == (H, W)
        assert x.dtype == dtype

    Cs = [int(x.shape[1]) for x in xs]
    Ctot = sum(Cs)
    HW = H * W
    itemsize = jnp.dtype(dtype).itemsize

    # Pure bandwidth: read every input once, write the output once.
    total_in_bytes = B * Ctot * HW * itemsize
    cost = pl.CostEstimate(flops=0, transcendentals=0,
                           bytes_accessed=2 * total_in_bytes)

    row_bytes = 2 * Ctot * HW * itemsize   # input + output slabs, 1 batch row
    bb = _pick_batch_block(B, row_bytes, block_bytes_target,
                           _MIN_BLOCK_BYTES, _TARGET_STEPS)

    if bb is not None:
        # ---- Lane-flat path: (B, C_i*HW) -> (B, Ctot*HW) --------------------
        xs_flat = [x.reshape(B, c * HW) for x, c in zip(xs, Cs)]
        block_bytes = bb * row_bytes
        kernel = functools.partial(_concat_lane_kernel,
                                   lane_sizes=tuple(c * HW for c in Cs))
        grid = (B // bb,)
        in_specs = [pl.BlockSpec((bb, c * HW), lambda b: (b, 0)) for c in Cs]
        out_specs = pl.BlockSpec((bb, Ctot * HW), lambda b: (b, 0))
        out_shape = jax.ShapeDtypeStruct((B, Ctot * HW), dtype)
        dims = ("parallel",)
    else:
        # ---- Channel-sliced path with HW lane tiling -------------------------
        xs_flat = [x.reshape(B, c, HW) for x, c in zip(xs, Cs)]
        hw_tile = _pick_hw_tile(HW, 2 * Ctot * itemsize, block_bytes_target)
        block_bytes = 2 * Ctot * hw_tile * itemsize
        kernel = functools.partial(_concat_channel_kernel,
                                   channel_sizes=tuple(Cs))
        grid = (B, pl.cdiv(HW, hw_tile))
        in_specs = [pl.BlockSpec((1, c, hw_tile), lambda b, s: (b, 0, s))
                    for c in Cs]
        out_specs = pl.BlockSpec((1, Ctot, hw_tile), lambda b, s: (b, 0, s))
        out_shape = jax.ShapeDtypeStruct((B, Ctot, HW), dtype)
        dims = ("parallel", "parallel")

    # Explicit scoped-VMEM limit: 2x for Pallas double-buffering plus headroom,
    # capped well under v7x's 64 MiB per-TC physical VMEM.
    vmem_limit = int(min(48 << 20, max(16 << 20, 4 * block_bytes)))

    out = pl.pallas_call(
        kernel,
        out_shape=out_shape,
        grid_spec=pltpu.PrefetchScalarGridSpec(
            num_scalar_prefetch=0,
            grid=grid,
            in_specs=in_specs,
            out_specs=out_specs,
        ),
        compiler_params=pltpu.CompilerParams(
            dimension_semantics=dims,
            vmem_limit_bytes=vmem_limit,
        ),
        cost_estimate=cost,
    )(*xs_flat)

    return out.reshape(B, Ctot, H, W)


if __name__ == "__main__":
    key = jax.random.PRNGKey(0)
    k1, k2, k3, k4 = jax.random.split(key, 4)

    # Typical yolov5 Concat: two NCHW feature maps with different channel counts.
    x1 = jax.random.normal(k1, (2, 4, 16, 16), dtype=jnp.float32)
    x2 = jax.random.normal(k2, (2, 8, 16, 16), dtype=jnp.float32)
    out = jax.block_until_ready(concat([x1, x2], dimension=1))
    ref = jnp.concatenate([x1, x2], axis=1)
    assert out.shape == ref.shape, (out.shape, ref.shape)
    assert jnp.array_equal(out, ref), "lane-flat path mismatch vs reference"

    # Also exercise the channel-sliced / HW-tiled fallback path (used for large
    # feature maps or B=1) by forcing a tiny per-step block target.
    y1 = jax.random.normal(k3, (1, 4, 16, 16), dtype=jnp.float32)
    y2 = jax.random.normal(k4, (1, 8, 16, 16), dtype=jnp.float32)
    out2 = jax.block_until_ready(
        concat([y1, y2], dimension=1, block_bytes_target=8 << 10))
    ref2 = jnp.concatenate([y1, y2], axis=1)
    assert out2.shape == ref2.shape, (out2.shape, ref2.shape)
    assert jnp.array_equal(out2, ref2), "channel-tiled path mismatch vs reference"

    print("KERNEL_OK")
</pallas_src>

<mosaic_0001>
module attributes {stable_mosaic.version = 11 : i64} {
  func.func @_concat_lane_kernel(%arg0: i32, %arg1: memref<2x1024xf32, #tpu.memory_space<vmem>>, %arg2: memref<2x2048xf32, #tpu.memory_space<vmem>>, %arg3: memref<2x3072xf32, #tpu.memory_space<vmem>>) attributes {dimension_semantics = [#tpu.dimension_semantics<parallel>], iteration_bounds = array<i64: 1>, scalar_prefetch = 0 : i64, scratch_operands = 0 : i64, tpu.core_type = #tpu.core_type<tc>, window_params = [{transform_indices = @transform_0, window_bounds = array<i64: 2, 1024>}, {transform_indices = @transform_1, window_bounds = array<i64: 2, 2048>}, {transform_indices = @transform_2, window_bounds = array<i64: 2, 3072>}]} {
    %c0 = arith.constant 0 : index
    %c0_0 = arith.constant 0 : index
    %0 = vector.load %arg1[%c0, %c0_0] : memref<2x1024xf32, #tpu.memory_space<vmem>>, vector<2x1024xf32>
    %c0_1 = arith.constant 0 : index
    %c0_2 = arith.constant 0 : index
    %1 = vector.load %arg3[%c0_1, %c0_2] : memref<2x3072xf32, #tpu.memory_space<vmem>>, vector<2x1024xf32>
    tpu.vector_store %arg3[%c0_1, %c0_2], %0 {strides = array<i32>} : memref<2x3072xf32, #tpu.memory_space<vmem>>, vector<2x1024xf32>,
    %c0_3 = arith.constant 0 : index
    %c0_4 = arith.constant 0 : index
    %2 = vector.load %arg2[%c0_3, %c0_4] : memref<2x2048xf32, #tpu.memory_space<vmem>>, vector<2x2048xf32>
    %c0_5 = arith.constant 0 : index
    %c1024 = arith.constant 1024 : index
    %3 = vector.load %arg3[%c0_5, %c1024] : memref<2x3072xf32, #tpu.memory_space<vmem>>, vector<2x2048xf32>
    tpu.vector_store %arg3[%c0_5, %c1024], %2 {strides = array<i32>} : memref<2x3072xf32, #tpu.memory_space<vmem>>, vector<2x2048xf32>,
    return
  }
  func.func @transform_0(%arg0: i32) -> (i32, i32) {
    %c0_i32 = arith.constant 0 : i32
    %c0_i32_0 = arith.constant 0 : i32
    return %arg0, %c0_i32 : i32, i32
  }
  func.func @transform_1(%arg0: i32) -> (i32, i32) {
    %c0_i32 = arith.constant 0 : i32
    %c0_i32_0 = arith.constant 0 : i32
    return %arg0, %c0_i32 : i32, i32
  }
  func.func @transform_2(%arg0: i32) -> (i32, i32) {
    %c0_i32 = arith.constant 0 : i32
    %c0_i32_0 = arith.constant 0 : i32
    return %arg0, %c0_i32 : i32, i32
  }
}

</mosaic_0001>

<llo_original>
// kernel: tpu_custom_call.1
$region0: #{tpu_custom_call.1}
  #allocation0 [shape = 'u32[]', space=smem, size = 0x4, offset = 0x4, fixed_abs, tag = 'smem constant byte address 0x4 - core index']
  #allocation1 [shape = 'u32[72,128]{1,0:T(1,128)}', space=vmem, size = 0x9000, scoped, tag = 'internal scratch']
  %s0 = inlined_call_operand.hbm [shape: f32[2,1024], index: 0, kind: input, shape index: {}]
  %s1 = inlined_call_operand.hbm [shape: f32[2,2048], index: 1, kind: input, shape index: {}]
  %s2 = inlined_call_operand.hbm [shape: f32[2,3072], index: 2, kind: output, shape index: {}]
  %s3 = sld [smem:[#allocation0]]
  $region26: #{tpu_custom_call.1} parent=0
    _
  %s5 = ssub.s32 1, %s3
  %s6 = scalar_select 0, %s5, %s3
  $region1: #{tpu_custom_call.1} parent=0
    #allocation2 [shape = 'u8[8192]{0}', space=vmem, size = 0x2000, scoped, tag = 'input window, operand 0, single buffered']
    #allocation3 [shape = 's32[1]{0}', space=sflag, size = 0x4, scoped, tag = 'scoped memory for tpu_custom_call.1']
    #allocation4 [shape = 's32[1]{0}', space=sflag, size = 0x4, scoped, tag = 'scoped memory for tpu_custom_call.1']
    #allocation5 [shape = 'u8[16384]{0}', space=vmem, size = 0x4000, scoped, tag = 'input window, operand 1, single buffered']
    #allocation6 [shape = 's32[1]{0}', space=sflag, size = 0x4, scoped, tag = 'scoped memory for tpu_custom_call.1']
    #allocation7 [shape = 'u8[24576]{0}', space=vmem, size = 0x6000, scoped, tag = 'output window, operand 0, single buffered']
    %7 = vsyncpa [#allocation3], 0
    %8 = vsyncpa [#allocation6], 0
    %9 = vsyncpa [#allocation4], 0
    // Predicated region
    $region2: #{tpu_custom_call.1} parent=1 // pred_check
      _
    $region3: #{tpu_custom_call.1} parent=1 // pred_check_branch
      %11 = sbr.rel (0) target = $region5
    $region4: #{tpu_custom_call.1} parent=1 // pred_region
      %13 = vsyncadd [#allocation3], 0
      %s15 = sshll.u32 %s0, 4
      %s16 = int_to_ptr.hbm [resolvable:$true] %s15
      %s17 = sshll.u32 [#allocation2], 4
      %s18 = int_to_ptr.vmem [resolvable:$true] %s17
      %20 = dma.hbm_to_vmem [thread:$0]  %s16, 256, %s18, [#allocation3]
    $region5: #{tpu_custom_call.1} parent=1 // pred_fallthru
      _
    // Predicated region
    $region6: #{tpu_custom_call.1} parent=1 // pred_check
      _
    $region7: #{tpu_custom_call.1} parent=1 // pred_check_branch
      %22 = sbr.rel (0) target = $region9
    $region8: #{tpu_custom_call.1} parent=1 // pred_region
      %24 = vsyncadd [#allocation6], 0
      %s26 = sshll.u32 %s1, 4
      %s27 = int_to_ptr.hbm [resolvable:$true] %s26
      %s28 = sshll.u32 [#allocation5], 4
      %s29 = int_to_ptr.vmem [resolvable:$true] %s28
      %31 = dma.hbm_to_vmem [thread:$0]  %s27, 512, %s29, [#allocation6]
    $region9: #{tpu_custom_call.1} parent=1 // pred_fallthru
      _
    // Predicated region
    $region10: #{tpu_custom_call.1} parent=1 // pred_check
      _
    $region11: #{tpu_custom_call.1} parent=1 // pred_check_branch
      %33 = sbr.rel (0) target = $region13
    $region12: #{tpu_custom_call.1} parent=1 // pred_region
      %35 = dma.done [#allocation3], 256
    $region13: #{tpu_custom_call.1} parent=1 // pred_fallthru
      _
    // Predicated region
    $region14: #{tpu_custom_call.1} parent=1 // pred_check
      _
    $region15: #{tpu_custom_call.1} parent=1 // pred_check_branch
      %37 = sbr.rel (0) target = $region17
    $region16: #{tpu_custom_call.1} parent=1 // pred_region
      %39 = dma.done [#allocation6], 512
    $region17: #{tpu_custom_call.1} parent=1 // pred_fallthru
      _
    %v40 = vld [vmem:[#allocation2] sm:$0xff]
    %v41 = vld [vmem:[#allocation2 + $0x8] sm:$0xff]
    %42 = vst [vmem:[#allocation7] sm:$0xff] %v40
    %43 = vst [vmem:[#allocation7 + $0x8] sm:$0xff] %v41
    %v44 = vld [vmem:[#allocation5] sm:$0xff]
    %v45 = vld [vmem:[#allocation5 + $0x8] sm:$0xff]
    %v46 = vld [vmem:[#allocation5 + $0x10] sm:$0xff]
    %v47 = vld [vmem:[#allocation5 + $0x18] sm:$0xff]
    %48 = vst [vmem:[#allocation7 + $0x10] sm:$0xff] %v44
    %49 = vst [vmem:[#allocation7 + $0x18] sm:$0xff] %v45
    %50 = vst [vmem:[#allocation7 + $0x20] sm:$0xff] %v46
    %51 = vst [vmem:[#allocation7 + $0x28] sm:$0xff] %v47
    // Predicated region
    $region18: #{tpu_custom_call.1} parent=1 // pred_check
      _
    $region19: #{tpu_custom_call.1} parent=1 // pred_check_branch
      %53 = sbr.rel (0) target = $region21
    $region20: #{tpu_custom_call.1} parent=1 // pred_region
      %55 = vsyncadd [#allocation4], 0
      %s57 = sshll.u32 [#allocation7], 4
      %s58 = int_to_ptr.vmem [resolvable:$true] %s57
      %s59 = sshll.u32 %s2, 4
      %s60 = int_to_ptr.hbm [resolvable:$true] %s59
      %62 = dma.vmem_to_hbm [thread:$0]  %s58, 768, %s60, [#allocation4]
    $region21: #{tpu_custom_call.1} parent=1 // pred_fallthru
      _
    // Predicated region
    $region22: #{tpu_custom_call.1} parent=1 // pred_check
      _
    $region23: #{tpu_custom_call.1} parent=1 // pred_check_branch
      %64 = sbr.rel (0) target = $region25
    $region24: #{tpu_custom_call.1} parent=1 // pred_region
      %66 = dma.done [#allocation4], 768
    $region25: #{tpu_custom_call.1} parent=1 // pred_fallthru
      _
    %67 = vsyncpa [#allocation3], 1
    %68 = vsyncpa [#allocation6], 1
    %69 = vsyncpa [#allocation4], 1

</llo_original>
